<compile_context>
chip_gen: v7x
topology: tpu7x:2x2x1
jax: 0.10.0
libtpu: 0.0.40
codegen_flags: <defaults>
</compile_context>

<pallas_src>
import jax
import jax.numpy as jnp
from jax.experimental import pallas as pl
from jax.experimental.pallas import tpu as pltpu

# ----------------------- module hyper-parameters (small) -----------------------
IN_DIM = 32
H_DIM = 64
HD2 = H_DIM // 2          # 32
HD4 = H_DIM // 4          # 16
LN_EPS = 1e-5


# ------------------------------ in-kernel helpers ------------------------------

def _erf(x):
    # Abramowitz & Stegun 7.1.26 polynomial erf (|err| < 1.5e-7 ~ f32 eps).
    # Keeps nn.GELU(approximate='none') semantics without relying on a
    # lax.erf lowering inside Mosaic (only exp + VPU arithmetic needed).
    a1, a2, a3, a4, a5 = (0.254829592, -0.284496736, 1.421413741,
                          -1.453152027, 1.061405429)
    p = 0.3275911
    s = jnp.where(x >= 0.0, 1.0, -1.0)
    ax = jnp.abs(x)
    t = 1.0 / (1.0 + p * ax)
    poly = ((((a5 * t + a4) * t + a3) * t + a2) * t + a1) * t
    return s * (1.0 - poly * jnp.exp(-ax * ax))


def _gelu(x):
    # exact GELU: 0.5 * x * (1 + erf(x / sqrt(2)))
    return 0.5 * x * (1.0 + _erf(x * 0.7071067811865476))


# ================================ fused kernel =================================

def _mask_predictor_kernel(x_ref, g_ref, be_ref,
                           w1_ref, b1_ref,
                           w2a_ref, b2a_ref,
                           w2b_ref, b2b_ref,
                           w2c_ref, b2c_ref,
                           o_ref):
    """Entire MaskPredictor forward for one batch element, VMEM resident."""
    x = x_ref[0].astype(jnp.float32)                        # (L, Din)

    # ---- layer1: LayerNorm -> Linear -> GELU -----------------------------------
    mu = jnp.mean(x, axis=-1, keepdims=True)
    xc = x - mu
    var = jnp.mean(xc * xc, axis=-1, keepdims=True)
    xn = xc * jax.lax.rsqrt(var + LN_EPS) * g_ref[...] + be_ref[...]
    z = _gelu(jnp.dot(xn, w1_ref[...], preferred_element_type=jnp.float32)
              + b1_ref[...])                                # (L, H)

    # ---- split + per-sequence global mean ---------------------------------------
    z_local = z[:, :HD2]                                    # (L, H/2)
    z_gmean = jnp.mean(z[:, HD2:], axis=0, keepdims=True)   # (1, H/2)

    # cat([z_local, broadcast(z_gmean)], -1) @ W2a  ==  split matmul:
    #   z_local @ W2a[:H/2] + z_gmean @ W2a[H/2:]   (broadcast add over rows)
    w2a = w2a_ref[...]
    h = (jnp.dot(z_local, w2a[:HD2, :], preferred_element_type=jnp.float32)
         + jnp.dot(z_gmean, w2a[HD2:, :], preferred_element_type=jnp.float32)
         + b2a_ref[...])
    h = _gelu(h)                                            # (L, H/2)

    h = _gelu(jnp.dot(h, w2b_ref[...], preferred_element_type=jnp.float32)
              + b2b_ref[...])                               # (L, H/4)

    out = (jnp.dot(h, w2c_ref[...], preferred_element_type=jnp.float32)
           + b2c_ref[...])                                  # (L, 1)
    o_ref[0] = out.astype(o_ref.dtype)


def mask_predictor(params, x):
    """x: (B, L, IN_DIM) -> (B, L, 1). Single fused pallas_call."""
    B, L, Din = x.shape

    def full(shape):
        return pl.BlockSpec(shape, lambda b, _s=len(shape): (0,) * _s)

    return pl.pallas_call(
        _mask_predictor_kernel,
        out_shape=jax.ShapeDtypeStruct((B, L, 1), x.dtype),
        grid=(B,),
        in_specs=[pl.BlockSpec((1, L, Din), lambda b: (b, 0, 0)),   # x
                  full((1, Din)), full((1, Din)),                   # LN gamma/beta
                  full((Din, H_DIM)), full((1, H_DIM)),             # layer1 linear
                  full((H_DIM, HD2)), full((1, HD2)),               # layer2 lin 1
                  full((HD2, HD4)), full((1, HD4)),                 # layer2 lin 2
                  full((HD4, 1)), full((1, 1))],                    # layer2 lin 3
        out_specs=pl.BlockSpec((1, L, 1), lambda b: (b, 0, 0)),
        compiler_params=pltpu.CompilerParams(
            dimension_semantics=("parallel",)),   # shards batch across v7x TCs
    )(x, params["ln_g"], params["ln_b"],
      params["w1"], params["b1"],
      params["w2a"], params["b2a"],
      params["w2b"], params["b2b"],
      params["w2c"], params["b2c"])


# ----------------------------- pure-JAX reference ------------------------------

def mask_predictor_ref(params, x):
    hp = jax.lax.Precision.HIGHEST
    mu = jnp.mean(x, axis=-1, keepdims=True)
    var = jnp.mean((x - mu) ** 2, axis=-1, keepdims=True)
    xn = (x - mu) * jax.lax.rsqrt(var + LN_EPS) * params["ln_g"][0] + params["ln_b"][0]
    z = jax.nn.gelu(jnp.dot(xn, params["w1"], precision=hp) + params["b1"][0],
                    approximate=False)
    z_local, z_global = z[..., :HD2], z[..., HD2:]
    z_global = jnp.broadcast_to(jnp.mean(z_global, axis=1, keepdims=True),
                                z_local.shape)
    zc = jnp.concatenate([z_local, z_global], axis=-1)
    h = jax.nn.gelu(jnp.dot(zc, params["w2a"], precision=hp) + params["b2a"][0],
                    approximate=False)
    h = jax.nn.gelu(jnp.dot(h, params["w2b"], precision=hp) + params["b2b"][0],
                    approximate=False)
    return jnp.dot(h, params["w2c"], precision=hp) + params["b2c"][0]


# ============================== deterministic init ==============================

def init_params(key):
    ks = jax.random.split(key, 8)

    def w(k, shape, s=0.2):
        return jax.random.normal(k, shape, jnp.float32) * s

    # NOTE: weights stored as (in, out); loading from PyTorch nn.Linear
    # ((out, in) applied as x @ W^T) requires a transpose at load time.
    return {
        "ln_g": jnp.ones((1, IN_DIM), jnp.float32),
        "ln_b": jnp.zeros((1, IN_DIM), jnp.float32),
        "w1": w(ks[0], (IN_DIM, H_DIM)),
        "b1": w(ks[1], (1, H_DIM), 0.05),
        "w2a": w(ks[2], (H_DIM, HD2)),
        "b2a": w(ks[3], (1, HD2), 0.05),
        "w2b": w(ks[4], (HD2, HD4)),
        "b2b": w(ks[5], (1, HD4), 0.05),
        "w2c": w(ks[6], (HD4, 1)),
        "b2c": w(ks[7], (1, 1), 0.05),
    }


# ==================================== main =====================================

if __name__ == "__main__":
    key = jax.random.PRNGKey(0)
    k_param, k_x = jax.random.split(key)

    B, L = 2, 8
    params = init_params(k_param)
    x = jax.random.normal(k_x, (B, L, IN_DIM), jnp.float32)

    out = jax.jit(mask_predictor)(params, x)
    jax.block_until_ready(out)
    assert out.shape == (B, L, 1)

    ref = mask_predictor_ref(params, x)
    assert jnp.allclose(out, ref, rtol=2e-2, atol=2e-3), (
        float(jnp.max(jnp.abs(out - ref))))

    print("KERNEL_OK")
</pallas_src>

<mosaic_0001>
module attributes {stable_mosaic.version = 11 : i64} {
  func.func @_mask_predictor_kernel(%arg0: i32, %arg1: memref<1x8x32xf32, #tpu.memory_space<vmem>>, %arg2: memref<1x32xf32, #tpu.memory_space<vmem>>, %arg3: memref<1x32xf32, #tpu.memory_space<vmem>>, %arg4: memref<32x64xf32, #tpu.memory_space<vmem>>, %arg5: memref<1x64xf32, #tpu.memory_space<vmem>>, %arg6: memref<64x32xf32, #tpu.memory_space<vmem>>, %arg7: memref<1x32xf32, #tpu.memory_space<vmem>>, %arg8: memref<32x16xf32, #tpu.memory_space<vmem>>, %arg9: memref<1x16xf32, #tpu.memory_space<vmem>>, %arg10: memref<16x1xf32, #tpu.memory_space<vmem>>, %arg11: memref<1x1xf32, #tpu.memory_space<vmem>>, %arg12: memref<1x8x1xf32, #tpu.memory_space<vmem>>) attributes {dimension_semantics = [#tpu.dimension_semantics<parallel>], iteration_bounds = array<i64: 2>, scalar_prefetch = 0 : i64, scratch_operands = 0 : i64, tpu.core_type = #tpu.core_type<tc>, window_params = [{transform_indices = @transform_0, window_bounds = array<i64: 1, 8, 32>}, {pipeline_mode = #tpu.pipeline_mode<synchronous>, transform_indices = @transform_1, window_bounds = array<i64: 1, 32>}, {pipeline_mode = #tpu.pipeline_mode<synchronous>, transform_indices = @transform_2, window_bounds = array<i64: 1, 32>}, {pipeline_mode = #tpu.pipeline_mode<synchronous>, transform_indices = @transform_3, window_bounds = array<i64: 32, 64>}, {pipeline_mode = #tpu.pipeline_mode<synchronous>, transform_indices = @transform_4, window_bounds = array<i64: 1, 64>}, {pipeline_mode = #tpu.pipeline_mode<synchronous>, transform_indices = @transform_5, window_bounds = array<i64: 64, 32>}, {pipeline_mode = #tpu.pipeline_mode<synchronous>, transform_indices = @transform_6, window_bounds = array<i64: 1, 32>}, {pipeline_mode = #tpu.pipeline_mode<synchronous>, transform_indices = @transform_7, window_bounds = array<i64: 32, 16>}, {pipeline_mode = #tpu.pipeline_mode<synchronous>, transform_indices = @transform_8, window_bounds = array<i64: 1, 16>}, {pipeline_mode = #tpu.pipeline_mode<synchronous>, transform_indices = @transform_9, window_bounds = array<i64: 16, 1>}, {pipeline_mode = #tpu.pipeline_mode<synchronous>, transform_indices = @transform_10, window_bounds = array<i64: 1, 1>}, {transform_indices = @transform_11, window_bounds = array<i64: 1, 8, 1>}]} {
    %c0 = arith.constant 0 : index
    %c0_0 = arith.constant 0 : index
    %c0_1 = arith.constant 0 : index
    %0 = vector.load %arg1[%c0, %c0_0, %c0_1] : memref<1x8x32xf32, #tpu.memory_space<vmem>>, vector<1x8x32xf32>
    %1 = vector.shape_cast %0 : vector<1x8x32xf32> to vector<8x32xf32>
    %cst = arith.constant dense<0.000000e+00> : vector<8xf32>
    %2 = vector.multi_reduction <add>, %1, %cst [1] : vector<8x32xf32> to vector<8xf32>
    %3 = vector.shape_cast %2 : vector<8xf32> to vector<8x1xf32>
    %cst_2 = arith.constant 3.200000e+01 : f32
    %4 = vector.broadcast %cst_2 : f32 to vector<8x1xf32>
    %5 = arith.divf %3, %4 : vector<8x1xf32>
    %6 = vector.broadcast %5 : vector<8x1xf32> to vector<8x32xf32>
    %7 = arith.subf %1, %6 : vector<8x32xf32>
    %8 = arith.mulf %7, %7 : vector<8x32xf32>
    %cst_3 = arith.constant dense<0.000000e+00> : vector<8xf32>
    %9 = vector.multi_reduction <add>, %8, %cst_3 [1] : vector<8x32xf32> to vector<8xf32>
    %10 = vector.shape_cast %9 : vector<8xf32> to vector<8x1xf32>
    %cst_4 = arith.constant 3.200000e+01 : f32
    %11 = vector.broadcast %cst_4 : f32 to vector<8x1xf32>
    %12 = arith.divf %10, %11 : vector<8x1xf32>
    %cst_5 = arith.constant 9.99999974E-6 : f32
    %13 = vector.broadcast %cst_5 : f32 to vector<8x1xf32>
    %14 = arith.addf %12, %13 : vector<8x1xf32>
    %15 = math.rsqrt %14 : vector<8x1xf32>
    %16 = vector.broadcast %15 : vector<8x1xf32> to vector<8x32xf32>
    %17 = arith.mulf %7, %16 : vector<8x32xf32>
    %c0_6 = arith.constant 0 : index
    %c0_7 = arith.constant 0 : index
    %18 = vector.load %arg2[%c0_6, %c0_7] : memref<1x32xf32, #tpu.memory_space<vmem>>, vector<1x32xf32>
    %19 = vector.broadcast %18 : vector<1x32xf32> to vector<8x32xf32>
    %20 = arith.mulf %17, %19 : vector<8x32xf32>
    %c0_8 = arith.constant 0 : index
    %c0_9 = arith.constant 0 : index
    %21 = vector.load %arg3[%c0_8, %c0_9] : memref<1x32xf32, #tpu.memory_space<vmem>>, vector<1x32xf32>
    %22 = vector.broadcast %21 : vector<1x32xf32> to vector<8x32xf32>
    %23 = arith.addf %20, %22 : vector<8x32xf32>
    %c0_10 = arith.constant 0 : index
    %c0_11 = arith.constant 0 : index
    %24 = vector.load %arg4[%c0_10, %c0_11] : memref<32x64xf32, #tpu.memory_space<vmem>>, vector<32x64xf32>
    %cst_12 = arith.constant dense<0.000000e+00> : vector<8x64xf32>
    %25 = tpu.matmul %23, %24, %cst_12 {dimension_numbers = #tpu.dot_dimension_numbers<[1], [0], [0], [1], [0, 0, 1, 1], [], []>} : vector<8x32xf32>, vector<32x64xf32>, vector<8x64xf32> -> vector<8x64xf32>
    %c0_13 = arith.constant 0 : index
    %c0_14 = arith.constant 0 : index
    %26 = vector.load %arg5[%c0_13, %c0_14] : memref<1x64xf32, #tpu.memory_space<vmem>>, vector<1x64xf32>
    %27 = vector.broadcast %26 : vector<1x64xf32> to vector<8x64xf32>
    %28 = arith.addf %25, %27 : vector<8x64xf32>
    %cst_15 = arith.constant 5.000000e-01 : f32
    %29 = vector.broadcast %cst_15 : f32 to vector<8x64xf32>
    %30 = arith.mulf %29, %28 : vector<8x64xf32>
    %cst_16 = arith.constant 0.707106769 : f32
    %31 = vector.broadcast %cst_16 : f32 to vector<8x64xf32>
    %32 = arith.mulf %28, %31 : vector<8x64xf32>
    %cst_17 = arith.constant 0.000000e+00 : f32
    %33 = vector.broadcast %cst_17 : f32 to vector<8x64xf32>
    %34 = arith.cmpf oge, %32, %33 : vector<8x64xf32>
    %cst_18 = arith.constant 1.000000e+00 : f32
    %cst_19 = arith.constant -1.000000e+00 : f32
    %35 = vector.broadcast %cst_18 : f32 to vector<8x64xf32>
    %36 = vector.broadcast %cst_19 : f32 to vector<8x64xf32>
    %37 = arith.select %34, %35, %36 : vector<8x64xi1>, vector<8x64xf32>
    %38 = math.absf %32 : vector<8x64xf32>
    %cst_20 = arith.constant 0.327591091 : f32
    %39 = vector.broadcast %cst_20 : f32 to vector<8x64xf32>
    %40 = arith.mulf %39, %38 : vector<8x64xf32>
    %cst_21 = arith.constant 1.000000e+00 : f32
    %41 = vector.broadcast %cst_21 : f32 to vector<8x64xf32>
    %42 = arith.addf %41, %40 : vector<8x64xf32>
    %cst_22 = arith.constant 1.000000e+00 : f32
    %43 = vector.broadcast %cst_22 : f32 to vector<8x64xf32>
    %44 = arith.divf %43, %42 : vector<8x64xf32>
    %cst_23 = arith.constant 1.06140542 : f32
    %45 = vector.broadcast %cst_23 : f32 to vector<8x64xf32>
    %46 = arith.mulf %45, %44 : vector<8x64xf32>
    %cst_24 = arith.constant -1.45315206 : f32
    %47 = vector.broadcast %cst_24 : f32 to vector<8x64xf32>
    %48 = arith.addf %46, %47 : vector<8x64xf32>
    %49 = arith.mulf %48, %44 : vector<8x64xf32>
    %cst_25 = arith.constant 1.42141378 : f32
    %50 = vector.broadcast %cst_25 : f32 to vector<8x64xf32>
    %51 = arith.addf %49, %50 : vector<8x64xf32>
    %52 = arith.mulf %51, %44 : vector<8x64xf32>
    %cst_26 = arith.constant -0.284496725 : f32
    %53 = vector.broadcast %cst_26 : f32 to vector<8x64xf32>
    %54 = arith.addf %52, %53 : vector<8x64xf32>
    %55 = arith.mulf %54, %44 : vector<8x64xf32>
    %cst_27 = arith.constant 0.254829586 : f32
    %56 = vector.broadcast %cst_27 : f32 to vector<8x64xf32>
    %57 = arith.addf %55, %56 : vector<8x64xf32>
    %58 = arith.mulf %57, %44 : vector<8x64xf32>
    %cst_28 = arith.constant 0.000000e+00 : f32
    %59 = vector.broadcast %cst_28 : f32 to vector<8x64xf32>
    %60 = arith.subf %59, %38 : vector<8x64xf32>
    %61 = arith.mulf %60, %38 : vector<8x64xf32>
    %62 = math.exp %61 : vector<8x64xf32>
    %63 = arith.mulf %58, %62 : vector<8x64xf32>
    %cst_29 = arith.constant 1.000000e+00 : f32
    %64 = vector.broadcast %cst_29 : f32 to vector<8x64xf32>
    %65 = arith.subf %64, %63 : vector<8x64xf32>
    %66 = arith.mulf %37, %65 : vector<8x64xf32>
    %cst_30 = arith.constant 1.000000e+00 : f32
    %67 = vector.broadcast %cst_30 : f32 to vector<8x64xf32>
    %68 = arith.addf %67, %66 : vector<8x64xf32>
    %69 = arith.mulf %30, %68 : vector<8x64xf32>
    %70 = vector.extract_strided_slice %69 {offsets = [0, 0], sizes = [8, 32], strides = [1, 1]} : vector<8x64xf32> to vector<8x32xf32>
    %71 = vector.extract_strided_slice %69 {offsets = [0, 32], sizes = [8, 32], strides = [1, 1]} : vector<8x64xf32> to vector<8x32xf32>
    %cst_31 = arith.constant dense<0.000000e+00> : vector<32xf32>
    %72 = vector.multi_reduction <add>, %71, %cst_31 [0] : vector<8x32xf32> to vector<32xf32>
    %73 = vector.shape_cast %72 : vector<32xf32> to vector<1x32xf32>
    %cst_32 = arith.constant 8.000000e+00 : f32
    %74 = vector.broadcast %cst_32 : f32 to vector<1x32xf32>
    %75 = arith.divf %73, %74 : vector<1x32xf32>
    %c0_33 = arith.constant 0 : index
    %c0_34 = arith.constant 0 : index
    %76 = vector.load %arg6[%c0_33, %c0_34] : memref<64x32xf32, #tpu.memory_space<vmem>>, vector<64x32xf32>
    %77 = vector.extract_strided_slice %76 {offsets = [0, 0], sizes = [32, 32], strides = [1, 1]} : vector<64x32xf32> to vector<32x32xf32>
    %cst_35 = arith.constant dense<0.000000e+00> : vector<8x32xf32>
    %78 = tpu.matmul %70, %77, %cst_35 {dimension_numbers = #tpu.dot_dimension_numbers<[1], [0], [0], [1], [0, 0, 1, 1], [], []>} : vector<8x32xf32>, vector<32x32xf32>, vector<8x32xf32> -> vector<8x32xf32>
    %79 = vector.extract_strided_slice %76 {offsets = [32, 0], sizes = [32, 32], strides = [1, 1]} : vector<64x32xf32> to vector<32x32xf32>
    %cst_36 = arith.constant dense<0.000000e+00> : vector<1x32xf32>
    %80 = tpu.matmul %75, %79, %cst_36 {dimension_numbers = #tpu.dot_dimension_numbers<[1], [0], [0], [1], [0, 0, 1, 1], [], []>} : vector<1x32xf32>, vector<32x32xf32>, vector<1x32xf32> -> vector<1x32xf32>
    %81 = vector.broadcast %80 : vector<1x32xf32> to vector<8x32xf32>
    %82 = arith.addf %78, %81 : vector<8x32xf32>
    %c0_37 = arith.constant 0 : index
    %c0_38 = arith.constant 0 : index
    %83 = vector.load %arg7[%c0_37, %c0_38] : memref<1x32xf32, #tpu.memory_space<vmem>>, vector<1x32xf32>
    %84 = vector.broadcast %83 : vector<1x32xf32> to vector<8x32xf32>
    %85 = arith.addf %82, %84 : vector<8x32xf32>
    %cst_39 = arith.constant 5.000000e-01 : f32
    %86 = vector.broadcast %cst_39 : f32 to vector<8x32xf32>
    %87 = arith.mulf %86, %85 : vector<8x32xf32>
    %cst_40 = arith.constant 0.707106769 : f32
    %88 = vector.broadcast %cst_40 : f32 to vector<8x32xf32>
    %89 = arith.mulf %85, %88 : vector<8x32xf32>
    %cst_41 = arith.constant 0.000000e+00 : f32
    %90 = vector.broadcast %cst_41 : f32 to vector<8x32xf32>
    %91 = arith.cmpf oge, %89, %90 : vector<8x32xf32>
    %cst_42 = arith.constant 1.000000e+00 : f32
    %cst_43 = arith.constant -1.000000e+00 : f32
    %92 = vector.broadcast %cst_42 : f32 to vector<8x32xf32>
    %93 = vector.broadcast %cst_43 : f32 to vector<8x32xf32>
    %94 = arith.select %91, %92, %93 : vector<8x32xi1>, vector<8x32xf32>
    %95 = math.absf %89 : vector<8x32xf32>
    %cst_44 = arith.constant 0.327591091 : f32
    %96 = vector.broadcast %cst_44 : f32 to vector<8x32xf32>
    %97 = arith.mulf %96, %95 : vector<8x32xf32>
    %cst_45 = arith.constant 1.000000e+00 : f32
    %98 = vector.broadcast %cst_45 : f32 to vector<8x32xf32>
    %99 = arith.addf %98, %97 : vector<8x32xf32>
    %cst_46 = arith.constant 1.000000e+00 : f32
    %100 = vector.broadcast %cst_46 : f32 to vector<8x32xf32>
    %101 = arith.divf %100, %99 : vector<8x32xf32>
    %cst_47 = arith.constant 1.06140542 : f32
    %102 = vector.broadcast %cst_47 : f32 to vector<8x32xf32>
    %103 = arith.mulf %102, %101 : vector<8x32xf32>
    %cst_48 = arith.constant -1.45315206 : f32
    %104 = vector.broadcast %cst_48 : f32 to vector<8x32xf32>
    %105 = arith.addf %103, %104 : vector<8x32xf32>
    %106 = arith.mulf %105, %101 : vector<8x32xf32>
    %cst_49 = arith.constant 1.42141378 : f32
    %107 = vector.broadcast %cst_49 : f32 to vector<8x32xf32>
    %108 = arith.addf %106, %107 : vector<8x32xf32>
    %109 = arith.mulf %108, %101 : vector<8x32xf32>
    %cst_50 = arith.constant -0.284496725 : f32
    %110 = vector.broadcast %cst_50 : f32 to vector<8x32xf32>
    %111 = arith.addf %109, %110 : vector<8x32xf32>
    %112 = arith.mulf %111, %101 : vector<8x32xf32>
    %cst_51 = arith.constant 0.254829586 : f32
    %113 = vector.broadcast %cst_51 : f32 to vector<8x32xf32>
    %114 = arith.addf %112, %113 : vector<8x32xf32>
    %115 = arith.mulf %114, %101 : vector<8x32xf32>
    %cst_52 = arith.constant 0.000000e+00 : f32
    %116 = vector.broadcast %cst_52 : f32 to vector<8x32xf32>
    %117 = arith.subf %116, %95 : vector<8x32xf32>
    %118 = arith.mulf %117, %95 : vector<8x32xf32>
    %119 = math.exp %118 : vector<8x32xf32>
    %120 = arith.mulf %115, %119 : vector<8x32xf32>
    %cst_53 = arith.constant 1.000000e+00 : f32
    %121 = vector.broadcast %cst_53 : f32 to vector<8x32xf32>
    %122 = arith.subf %121, %120 : vector<8x32xf32>
    %123 = arith.mulf %94, %122 : vector<8x32xf32>
    %cst_54 = arith.constant 1.000000e+00 : f32
    %124 = vector.broadcast %cst_54 : f32 to vector<8x32xf32>
    %125 = arith.addf %124, %123 : vector<8x32xf32>
    %126 = arith.mulf %87, %125 : vector<8x32xf32>
    %c0_55 = arith.constant 0 : index
    %c0_56 = arith.constant 0 : index
    %127 = vector.load %arg8[%c0_55, %c0_56] : memref<32x16xf32, #tpu.memory_space<vmem>>, vector<32x16xf32>
    %cst_57 = arith.constant dense<0.000000e+00> : vector<8x16xf32>
    %128 = tpu.matmul %126, %127, %cst_57 {dimension_numbers = #tpu.dot_dimension_numbers<[1], [0], [0], [1], [0, 0, 1, 1], [], []>} : vector<8x32xf32>, vector<32x16xf32>, vector<8x16xf32> -> vector<8x16xf32>
    %c0_58 = arith.constant 0 : index
    %c0_59 = arith.constant 0 : index
    %129 = vector.load %arg9[%c0_58, %c0_59] : memref<1x16xf32, #tpu.memory_space<vmem>>, vector<1x16xf32>
    %130 = vector.broadcast %129 : vector<1x16xf32> to vector<8x16xf32>
    %131 = arith.addf %128, %130 : vector<8x16xf32>
    %cst_60 = arith.constant 5.000000e-01 : f32
    %132 = vector.broadcast %cst_60 : f32 to vector<8x16xf32>
    %133 = arith.mulf %132, %131 : vector<8x16xf32>
    %cst_61 = arith.constant 0.707106769 : f32
    %134 = vector.broadcast %cst_61 : f32 to vector<8x16xf32>
    %135 = arith.mulf %131, %134 : vector<8x16xf32>
    %cst_62 = arith.constant 0.000000e+00 : f32
    %136 = vector.broadcast %cst_62 : f32 to vector<8x16xf32>
    %137 = arith.cmpf oge, %135, %136 : vector<8x16xf32>
    %cst_63 = arith.constant 1.000000e+00 : f32
    %cst_64 = arith.constant -1.000000e+00 : f32
    %138 = vector.broadcast %cst_63 : f32 to vector<8x16xf32>
    %139 = vector.broadcast %cst_64 : f32 to vector<8x16xf32>
    %140 = arith.select %137, %138, %139 : vector<8x16xi1>, vector<8x16xf32>
    %141 = math.absf %135 : vector<8x16xf32>
    %cst_65 = arith.constant 0.327591091 : f32
    %142 = vector.broadcast %cst_65 : f32 to vector<8x16xf32>
    %143 = arith.mulf %142, %141 : vector<8x16xf32>
    %cst_66 = arith.constant 1.000000e+00 : f32
    %144 = vector.broadcast %cst_66 : f32 to vector<8x16xf32>
    %145 = arith.addf %144, %143 : vector<8x16xf32>
    %cst_67 = arith.constant 1.000000e+00 : f32
    %146 = vector.broadcast %cst_67 : f32 to vector<8x16xf32>
    %147 = arith.divf %146, %145 : vector<8x16xf32>
    %cst_68 = arith.constant 1.06140542 : f32
    %148 = vector.broadcast %cst_68 : f32 to vector<8x16xf32>
    %149 = arith.mulf %148, %147 : vector<8x16xf32>
    %cst_69 = arith.constant -1.45315206 : f32
    %150 = vector.broadcast %cst_69 : f32 to vector<8x16xf32>
    %151 = arith.addf %149, %150 : vector<8x16xf32>
    %152 = arith.mulf %151, %147 : vector<8x16xf32>
    %cst_70 = arith.constant 1.42141378 : f32
    %153 = vector.broadcast %cst_70 : f32 to vector<8x16xf32>
    %154 = arith.addf %152, %153 : vector<8x16xf32>
    %155 = arith.mulf %154, %147 : vector<8x16xf32>
    %cst_71 = arith.constant -0.284496725 : f32
    %156 = vector.broadcast %cst_71 : f32 to vector<8x16xf32>
    %157 = arith.addf %155, %156 : vector<8x16xf32>
    %158 = arith.mulf %157, %147 : vector<8x16xf32>
    %cst_72 = arith.constant 0.254829586 : f32
    %159 = vector.broadcast %cst_72 : f32 to vector<8x16xf32>
    %160 = arith.addf %158, %159 : vector<8x16xf32>
    %161 = arith.mulf %160, %147 : vector<8x16xf32>
    %cst_73 = arith.constant 0.000000e+00 : f32
    %162 = vector.broadcast %cst_73 : f32 to vector<8x16xf32>
    %163 = arith.subf %162, %141 : vector<8x16xf32>
    %164 = arith.mulf %163, %141 : vector<8x16xf32>
    %165 = math.exp %164 : vector<8x16xf32>
    %166 = arith.mulf %161, %165 : vector<8x16xf32>
    %cst_74 = arith.constant 1.000000e+00 : f32
    %167 = vector.broadcast %cst_74 : f32 to vector<8x16xf32>
    %168 = arith.subf %167, %166 : vector<8x16xf32>
    %169 = arith.mulf %140, %168 : vector<8x16xf32>
    %cst_75 = arith.constant 1.000000e+00 : f32
    %170 = vector.broadcast %cst_75 : f32 to vector<8x16xf32>
    %171 = arith.addf %170, %169 : vector<8x16xf32>
    %172 = arith.mulf %133, %171 : vector<8x16xf32>
    %c0_76 = arith.constant 0 : index
    %c0_77 = arith.constant 0 : index
    %173 = vector.load %arg10[%c0_76, %c0_77] : memref<16x1xf32, #tpu.memory_space<vmem>>, vector<16x1xf32>
    %cst_78 = arith.constant dense<0.000000e+00> : vector<8x1xf32>
    %174 = tpu.matmul %172, %173, %cst_78 {dimension_numbers = #tpu.dot_dimension_numbers<[1], [0], [0], [1], [0, 0, 1, 1], [], []>} : vector<8x16xf32>, vector<16x1xf32>, vector<8x1xf32> -> vector<8x1xf32>
    %c0_79 = arith.constant 0 : index
    %c0_80 = arith.constant 0 : index
    %175 = vector.load %arg11[%c0_79, %c0_80] : memref<1x1xf32, #tpu.memory_space<vmem>>, vector<1x1xf32>
    %176 = vector.broadcast %175 : vector<1x1xf32> to vector<8x1xf32>
    %177 = arith.addf %174, %176 : vector<8x1xf32>
    %c0_81 = arith.constant 0 : index
    %c0_82 = arith.constant 0 : index
    %c0_83 = arith.constant 0 : index
    %178 = vector.load %arg12[%c0_81, %c0_82, %c0_83] : memref<1x8x1xf32, #tpu.memory_space<vmem>>, vector<1x8x1xf32>
    %179 = vector.shape_cast %178 : vector<1x8x1xf32> to vector<8x1xf32>
    %180 = vector.shape_cast %177 : vector<8x1xf32> to vector<1x8x1xf32>
    tpu.vector_store %arg12[%c0_81, %c0_82, %c0_83], %180 {strides = array<i32>} : memref<1x8x1xf32, #tpu.memory_space<vmem>>, vector<1x8x1xf32>,
    return
  }
  func.func @transform_0(%arg0: i32) -> (i32, i32, i32) {
    %c0_i32 = arith.constant 0 : i32
    %c0_i32_0 = arith.constant 0 : i32
    %c0_i32_1 = arith.constant 0 : i32
    return %arg0, %c0_i32, %c0_i32_0 : i32, i32, i32
  }
  func.func @transform_1(%arg0: i32) -> (i32, i32) {
    %c0_i32 = arith.constant 0 : i32
    %c0_i32_0 = arith.constant 0 : i32
    %c0_i32_1 = arith.constant 0 : i32
    return %c0_i32, %c0_i32_0 : i32, i32
  }
  func.func @transform_2(%arg0: i32) -> (i32, i32) {
    %c0_i32 = arith.constant 0 : i32
    %c0_i32_0 = arith.constant 0 : i32
    %c0_i32_1 = arith.constant 0 : i32
    return %c0_i32, %c0_i32_0 : i32, i32
  }
  func.func @transform_3(%arg0: i32) -> (i32, i32) {
    %c0_i32 = arith.constant 0 : i32
    %c0_i32_0 = arith.constant 0 : i32
    %c0_i32_1 = arith.constant 0 : i32
    return %c0_i32, %c0_i32_0 : i32, i32
  }
  func.func @transform_4(%arg0: i32) -> (i32, i32) {
    %c0_i32 = arith.constant 0 : i32
    %c0_i32_0 = arith.constant 0 : i32
    %c0_i32_1 = arith.constant 0 : i32
    return %c0_i32, %c0_i32_0 : i32, i32
  }
  func.func @transform_5(%arg0: i32) -> (i32, i32) {
    %c0_i32 = arith.constant 0 : i32
    %c0_i32_0 = arith.constant 0 : i32
    %c0_i32_1 = arith.constant 0 : i32
    return %c0_i32, %c0_i32_0 : i32, i32
  }
  func.func @transform_6(%arg0: i32) -> (i32, i32) {
    %c0_i32 = arith.constant 0 : i32
    %c0_i32_0 = arith.constant 0 : i32
    %c0_i32_1 = arith.constant 0 : i32
    return %c0_i32, %c0_i32_0 : i32, i32
  }
  func.func @transform_7(%arg0: i32) -> (i32, i32) {
    %c0_i32 = arith.constant 0 : i32
    %c0_i32_0 = arith.constant 0 : i32
    %c0_i32_1 = arith.constant 0 : i32
    return %c0_i32, %c0_i32_0 : i32, i32
  }
  func.func @transform_8(%arg0: i32) -> (i32, i32) {
    %c0_i32 = arith.constant 0 : i32
    %c0_i32_0 = arith.constant 0 : i32
    %c0_i32_1 = arith.constant 0 : i32
    return %c0_i32, %c0_i32_0 : i32, i32
  }
  func.func @transform_9(%arg0: i32) -> (i32, i32) {
    %c0_i32 = arith.constant 0 : i32
    %c0_i32_0 = arith.constant 0 : i32
    %c0_i32_1 = arith.constant 0 : i32
    return %c0_i32, %c0_i32_0 : i32, i32
  }
  func.func @transform_10(%arg0: i32) -> (i32, i32) {
    %c0_i32 = arith.constant 0 : i32
    %c0_i32_0 = arith.constant 0 : i32
    %c0_i32_1 = arith.constant 0 : i32
    return %c0_i32, %c0_i32_0 : i32, i32
  }
  func.func @transform_11(%arg0: i32) -> (i32, i32, i32) {
    %c0_i32 = arith.constant 0 : i32
    %c0_i32_0 = arith.constant 0 : i32
    %c0_i32_1 = arith.constant 0 : i32
    return %arg0, %c0_i32, %c0_i32_0 : i32, i32, i32
  }
}

</mosaic_0001>

<llo_original>
// kernel: mask_predictor.1
$region0: #{mask_predictor.1}
  #allocation0 [shape = 'u32[]', space=smem, size = 0x4, offset = 0x4, fixed_abs, tag = 'smem constant byte address 0x4 - core index']
  #allocation1 [shape = 'u32[144,128]{1,0:T(1,128)}', space=vmem, size = 0x12000, scoped, tag = 'internal scratch']
  #allocation2 [shape = 'f32[1,1]{1,0:T(1,128)S(1)}', space=vmem, size = 0x200, scoped, tag = 'scoped memory for mask_predictor.1']
  %s0 = inlined_call_operand.vmem [shape: f32[2,8,32], index: 0, kind: input, shape index: {}]
  %s1 = inlined_call_operand.vmem [shape: f32[1,32], index: 1, kind: input, shape index: {}]
  %s2 = inlined_call_operand.vmem [shape: f32[1,32], index: 2, kind: input, shape index: {}]
  %s3 = inlined_call_operand.vmem [shape: f32[32,64], index: 3, kind: input, shape index: {}]
  %s4 = inlined_call_operand.vmem [shape: f32[1,64], index: 4, kind: input, shape index: {}]
  %s5 = inlined_call_operand.vmem [shape: f32[64,32], index: 5, kind: input, shape index: {}]
  %s6 = inlined_call_operand.vmem [shape: f32[1,32], index: 6, kind: input, shape index: {}]
  %s7 = inlined_call_operand.vmem [shape: f32[32,16], index: 7, kind: input, shape index: {}]
  %s8 = inlined_call_operand.vmem [shape: f32[1,16], index: 8, kind: input, shape index: {}]
  %s9 = inlined_call_operand.vmem [shape: f32[16,1], index: 9, kind: input, shape index: {}]
  %s10 = inlined_call_operand.<no memory space> [shape: f32[1,1], index: 10, kind: input, shape index: {}]
  %s11 = inlined_call_operand.vmem [shape: f32[2,8,1], index: 11, kind: output, shape index: {}]
  %s12 = sld [smem:[#allocation0]]
  $region77: #{mask_predictor.1} parent=0
    _
  %s14 = ssub.s32 1, %s12
  %s15 = scalar_select 0, %s14, %s12
  %v16 = vstv %s10
  %17 = vst [vmem:[#allocation2] sm:$0x1] %v16
  loop: start=0, step=1, limit=4
  $region2: #{mask_predictor.1} parent=0 // loop_pre_header
    _
  $region3: #{mask_predictor.1} parent=0 // loop_header
    %s19 = sphi 0, %s23
    %p20 = scmp.ge.s32.totalorder %s19, 4
    %s29 = sphi 0, %s31
    %s32 = sphi 0, %s29
    %s33 = sphi 0, %s32
    %s49 = sphi 0, %s33
    %s53 = sphi 0, %s53
    %s55 = sphi 0, %s53
    %s56 = sphi 0, %s55
    %s70 = sphi 0, %s56
    %s74 = sphi 0, %s74
    %s76 = sphi 0, %s74
    %s77 = sphi 0, %s76
    %s91 = sphi 0, %s77
    %s95 = sphi 0, %s95
    %s97 = sphi 0, %s95
    %s98 = sphi 0, %s97
    %s112 = sphi 0, %s98
    %s116 = sphi 0, %s116
    %s118 = sphi 0, %s116
    %s119 = sphi 0, %s118
    %s133 = sphi 0, %s119
    %s137 = sphi 0, %s137
    %s139 = sphi 0, %s137
    %s140 = sphi 0, %s139
    %s154 = sphi 0, %s140
    %s158 = sphi 0, %s158
    %s160 = sphi 0, %s158
    %s161 = sphi 0, %s160
    %s175 = sphi 0, %s161
    %s179 = sphi 0, %s179
    %s181 = sphi 0, %s179
    %s182 = sphi 0, %s181
    %s196 = sphi 0, %s182
    %s200 = sphi 0, %s200
    %s202 = sphi 0, %s200
    %s203 = sphi 0, %s202
    %s217 = sphi 0, %s203
    %s221 = sphi 0, %s221
    %s223 = sphi 0, %s221
    %s224 = sphi 0, %s223
    %s238 = sphi 0, %s224
    %s242 = sphi 0, %s242
    %s244 = sphi 0, %s242
    %s245 = sphi 0, %s244
    %s259 = sphi 0, %s245
    %s265 = sphi 0, %s267
    %s268 = sphi 0, %s265
    %s269 = sphi 0, %s268
    %s285 = sphi 0, %s269
  $region4: #{mask_predictor.1} parent=0 // loop_header_branch
    %22 = sbr.rel (%p20) target = $region8
  $region5: #{mask_predictor.1} parent=0 // loop_body
    %s24 = ssub.s32 %s19, 1
    %s25 = ssub.s32 %s19, 2
    %s26 = sadd.s32 %s19, 1
    %s27 = ssub.s32 %s19, %s26
    %p28 = scmp.eq.s32.totalorder %s27, 0
    %s30 = sadd.s32 %s29, 1
    %s31 = scalar_select %p28, %s29, %s30
    %p34 = pneg %p28
    %p35 = scmp.eq.s32.totalorder %s19, 1
    %p36 = por %p34, %p35
    %p37 = scmp.ne.s32.totalorder %s29, %s32
    %p38 = scmp.eq.s32.totalorder %s19, 0
    %p39 = por %p37, %p38
    %p40 = scmp.ne.s32.totalorder %s29, %s32
    %p41 = scmp.eq.s32.totalorder %s24, 1
    %p42 = por %p40, %p41
    %p43 = scmp.ne.s32.totalorder %s32, %s33
    %p44 = scmp.eq.s32.totalorder %s24, 0
    %p45 = por %p43, %p44
    %p46 = scmp.ne.s32.totalorder %s32, %s33
    %p47 = scmp.eq.s32.totalorder %s25, 1
    %p48 = por %p46, %p47
    %p50 = scmp.ne.s32.totalorder %s33, %s49
    %p51 = scmp.eq.s32.totalorder %s25, 0
    %p52 = por %p50, %p51
    %s54 = sadd.s32 %s53, 1
    %p57 = scmp.eq.s32.totalorder %s19, 1
    %p58 = scmp.ne.s32.totalorder %s53, %s55
    %p59 = scmp.eq.s32.totalorder %s19, 0
    %p60 = por %p58, %p59
    %p61 = scmp.ne.s32.totalorder %s53, %s55
    %p62 = scmp.eq.s32.totalorder %s24, 1
    %p63 = por %p61, %p62
    %p64 = scmp.ne.s32.totalorder %s55, %s56
    %p65 = scmp.eq.s32.totalorder %s24, 0
    %p66 = por %p64, %p65
    %p67 = scmp.ne.s32.totalorder %s55, %s56
    %p68 = scmp.eq.s32.totalorder %s25, 1
    %p69 = por %p67, %p68
    %p71 = scmp.ne.s32.totalorder %s56, %s70
    %p72 = scmp.eq.s32.totalorder %s25, 0
    %p73 = por %p71, %p72
    %s75 = sadd.s32 %s74, 1
    %p78 = scmp.eq.s32.totalorder %s19, 1
    %p79 = scmp.ne.s32.totalorder %s74, %s76
    %p80 = scmp.eq.s32.totalorder %s19, 0
    %p81 = por %p79, %p80
    %p82 = scmp.ne.s32.totalorder %s74, %s76
    %p83 = scmp.eq.s32.totalorder %s24, 1
    %p84 = por %p82, %p83
    %p85 = scmp.ne.s32.totalorder %s76, %s77
    %p86 = scmp.eq.s32.totalorder %s24, 0
    %p87 = por %p85, %p86
    %p88 = scmp.ne.s32.totalorder %s76, %s77
    %p89 = scmp.eq.s32.totalorder %s25, 1
    %p90 = por %p88, %p89
    %p92 = scmp.ne.s32.totalorder %s77, %s91
    %p93 = scmp.eq.s32.totalorder %s25, 0
    %p94 = por %p92, %p93
    %s96 = sadd.s32 %s95, 1
    %p99 = scmp.eq.s32.totalorder %s19, 1
    %p100 = scmp.ne.s32.totalorder %s95, %s97
    %p101 = scmp.eq.s32.totalorder %s19, 0
    %p102 = por %p100, %p101
    %p103 = scmp.ne.s32.totalorder %s95, %s97
    %p104 = scmp.eq.s32.totalorder %s24, 1
    %p105 = por %p103, %p104
    %p106 = scmp.ne.s32.totalorder %s97, %s98
    %p107 = scmp.eq.s32.totalorder %s24, 0
    %p108 = por %p106, %p107
    %p109 = scmp.ne.s32.totalorder %s97, %s98
    %p110 = scmp.eq.s32.totalorder %s25, 1
    %p111 = por %p109, %p110
    %p113 = scmp.ne.s32.totalorder %s98, %s112
    %p114 = scmp.eq.s32.totalorder %s25, 0
    %p115 = por %p113, %p114
    %s117 = sadd.s32 %s116, 1
    %p120 = scmp.eq.s32.totalorder %s19, 1
    %p121 = scmp.ne.s32.totalorder %s116, %s118
    %p122 = scmp.eq.s32.totalorder %s19, 0
    %p123 = por %p121, %p122
    %p124 = scmp.ne.s32.totalorder %s116, %s118
    %p125 = scmp.eq.s32.totalorder %s24, 1
    %p126 = por %p124, %p125
    %p127 = scmp.ne.s32.totalorder %s118, %s119
    %p128 = scmp.eq.s32.totalorder %s24, 0
    %p129 = por %p127, %p128
    %p130 = scmp.ne.s32.totalorder %s118, %s119
    %p131 = scmp.eq.s32.totalorder %s25, 1
    %p132 = por %p130, %p131
    %p134 = scmp.ne.s32.totalorder %s119, %s133
    %p135 = scmp.eq.s32.totalorder %s25, 0
    %p136 = por %p134, %p135
    %s138 = sadd.s32 %s137, 1
    %p141 = scmp.eq.s32.totalorder %s19, 1
    %p142 = scmp.ne.s32.totalorder %s137, %s139
    %p143 = scmp.eq.s32.totalorder %s19, 0
    %p144 = por %p142, %p143
    %p145 = scmp.ne.s32.totalorder %s137, %s139
    %p146 = scmp.eq.s32.totalorder %s24, 1
    %p147 = por %p145, %p146
    %p148 = scmp.ne.s32.totalorder %s139, %s140
    %p149 = scmp.eq.s32.totalorder %s24, 0
    %p150 = por %p148, %p149
    %p151 = scmp.ne.s32.totalorder %s139, %s140
    %p152 = scmp.eq.s32.totalorder %s25, 1
    %p153 = por %p151, %p152
    %p155 = scmp.ne.s32.totalorder %s140, %s154
    %p156 = scmp.eq.s32.totalorder %s25, 0
    %p157 = por %p155, %p156
    %s159 = sadd.s32 %s158, 1
    %p162 = scmp.eq.s32.totalorder %s19, 1
    %p163 = scmp.ne.s32.totalorder %s158, %s160
    %p164 = scmp.eq.s32.totalorder %s19, 0
    %p165 = por %p163, %p164
    %p166 = scmp.ne.s32.totalorder %s158, %s160
    %p167 = scmp.eq.s32.totalorder %s24, 1
    %p168 = por %p166, %p167
    %p169 = scmp.ne.s32.totalorder %s160, %s161
    %p170 = scmp.eq.s32.totalorder %s24, 0
    %p171 = por %p169, %p170
    %p172 = scmp.ne.s32.totalorder %s160, %s161
    %p173 = scmp.eq.s32.totalorder %s25, 1
    %p174 = por %p172, %p173
    %p176 = scmp.ne.s32.totalorder %s161, %s175
    %p177 = scmp.eq.s32.totalorder %s25, 0
    %p178 = por %p176, %p177
    %s180 = sadd.s32 %s179, 1
    %p183 = scmp.eq.s32.totalorder %s19, 1
    %p184 = scmp.ne.s32.totalorder %s179, %s181
    %p185 = scmp.eq.s32.totalorder %s19, 0
    %p186 = por %p184, %p185
    %p187 = scmp.ne.s32.totalorder %s179, %s181
    %p188 = scmp.eq.s32.totalorder %s24, 1
    %p189 = por %p187, %p188
    %p190 = scmp.ne.s32.totalorder %s181, %s182
    %p191 = scmp.eq.s32.totalorder %s24, 0
    %p192 = por %p190, %p191
    %p193 = scmp.ne.s32.totalorder %s181, %s182
    %p194 = scmp.eq.s32.totalorder %s25, 1
    %p195 = por %p193, %p194
    %p197 = scmp.ne.s32.totalorder %s182, %s196
    %p198 = scmp.eq.s32.totalorder %s25, 0
    %p199 = por %p197, %p198
    %s201 = sadd.s32 %s200, 1
    %p204 = scmp.eq.s32.totalorder %s19, 1
    %p205 = scmp.ne.s32.totalorder %s200, %s202
    %p206 = scmp.eq.s32.totalorder %s19, 0
    %p207 = por %p205, %p206
    %p208 = scmp.ne.s32.totalorder %s200, %s202
    %p209 = scmp.eq.s32.totalorder %s24, 1
    %p210 = por %p208, %p209
    %p211 = scmp.ne.s32.totalorder %s202, %s203
    %p212 = scmp.eq.s32.totalorder %s24, 0
    %p213 = por %p211, %p212
    %p214 = scmp.ne.s32.totalorder %s202, %s203
    %p215 = scmp.eq.s32.totalorder %s25, 1
    %p216 = por %p214, %p215
    %p218 = scmp.ne.s32.totalorder %s203, %s217
    %p219 = scmp.eq.s32.totalorder %s25, 0
    %p220 = por %p218, %p219
    %s222 = sadd.s32 %s221, 1
    %p225 = scmp.eq.s32.totalorder %s19, 1
    %p226 = scmp.ne.s32.totalorder %s221, %s223
    %p227 = scmp.eq.s32.totalorder %s19, 0
    %p228 = por %p226, %p227
    %p229 = scmp.ne.s32.totalorder %s221, %s223
    %p230 = scmp.eq.s32.totalorder %s24, 1
    %p231 = por %p229, %p230
    %p232 = scmp.ne.s32.totalorder %s223, %s224
    %p233 = scmp.eq.s32.totalorder %s24, 0
    %p234 = por %p232, %p233
    %p235 = scmp.ne.s32.totalorder %s223, %s224
    %p236 = scmp.eq.s32.totalorder %s25, 1
    %p237 = por %p235, %p236
    %p239 = scmp.ne.s32.totalorder %s224, %s238
    %p240 = scmp.eq.s32.totalorder %s25, 0
    %p241 = por %p239, %p240
    %s243 = sadd.s32 %s242, 1
    %p246 = scmp.eq.s32.totalorder %s19, 1
    %p247 = scmp.ne.s32.totalorder %s242, %s244
    %p248 = scmp.eq.s32.totalorder %s19, 0
    %p249 = por %p247, %p248
    %p250 = scmp.ne.s32.totalorder %s242, %s244
    %p251 = scmp.eq.s32.totalorder %s24, 1
    %p252 = por %p250, %p251
    %p253 = scmp.ne.s32.totalorder %s244, %s245
    %p254 = scmp.eq.s32.totalorder %s24, 0
    %p255 = por %p253, %p254
    %p256 = scmp.ne.s32.totalorder %s244, %s245
    %p257 = scmp.eq.s32.totalorder %s25, 1
    %p258 = por %p256, %p257
    %p260 = scmp.ne.s32.totalorder %s245, %s259
    %p261 = scmp.eq.s32.totalorder %s25, 0
    %p262 = por %p260, %p261
    %s263 = ssub.s32 %s19, %s26
    %p264 = scmp.eq.s32.totalorder %s263, 0
    %s266 = sadd.s32 %s265, 1
    %s267 = scalar_select %p264, %s265, %s266
    %p270 = pneg %p264
    %p271 = scmp.eq.s32.totalorder %s19, 1
    %p272 = por %p270, %p271
    %p273 = scmp.ne.s32.totalorder %s265, %s268
    %p274 = scmp.eq.s32.totalorder %s19, 0
    %p275 = por %p273, %p274
    %p276 = scmp.ne.s32.totalorder %s265, %s268
    %p277 = scmp.eq.s32.totalorder %s24, 1
    %p278 = por %p276, %p277
    %p279 = scmp.ne.s32.totalorder %s268, %s269
    %p280 = scmp.eq.s32.totalorder %s24, 0
    %p281 = por %p279, %p280
    %p282 = scmp.ne.s32.totalorder %s268, %s269
    %p283 = scmp.eq.s32.totalorder %s25, 1
    %p284 = por %p282, %p283
    %p286 = scmp.ne.s32.totalorder %s269, %s285
    %p287 = scmp.eq.s32.totalorder %s25, 0
    %p288 = por %p286, %p287
    %p289 = scmp.le.s32.totalorder 1, %s19
    %p290 = scmp.lt.s32.totalorder %s19, 3
    %p291 = pnand %p289, %p290
    %p292 = pneg %p291
    // Predicated region
    $region9: #{mask_predictor.1} parent=5 // pred_check
      _
    $region10: #{mask_predictor.1} parent=5 // pred_check_branch
      %294 = sbr.rel (%p291) target = $region12
    $region11: #{mask_predictor.1} parent=5 // pred_region
      %s295 = ssub.s32 %s19, 1
      // Predicated region
      $region13: #{mask_predictor.1} parent=11 // pred_check
        %p296 = pneg %p66
      $region14: #{mask_predictor.1} parent=11 // pred_check_branch
        %298 = sbr.rel (%p296) target = $region16
      $region15: #{mask_predictor.1} parent=11 // pred_region
        _
      $region16: #{mask_predictor.1} parent=11 // pred_fallthru
        _
      // Predicated region
      $region17: #{mask_predictor.1} parent=11 // pred_check
        %p299 = pneg %p87
      $region18: #{mask_predictor.1} parent=11 // pred_check_branch
        %301 = sbr.rel (%p299) target = $region20
      $region19: #{mask_predictor.1} parent=11 // pred_region
        _
      $region20: #{mask_predictor.1} parent=11 // pred_fallthru
        _
      // Predicated region
      $region21: #{mask_predictor.1} parent=11 // pred_check
        %p302 = pneg %p108
      $region22: #{mask_predictor.1} parent=11 // pred_check_branch
        %304 = sbr.rel (%p302) target = $region24
      $region23: #{mask_predictor.1} parent=11 // pred_region
        _
      $region24: #{mask_predictor.1} parent=11 // pred_fallthru
        _
      // Predicated region
      $region25: #{mask_predictor.1} parent=11 // pred_check
        %p305 = pneg %p129
      $region26: #{mask_predictor.1} parent=11 // pred_check_branch
        %307 = sbr.rel (%p305) target = $region28
      $region27: #{mask_predictor.1} parent=11 // pred_region
        _
      $region28: #{mask_predictor.1} parent=11 // pred_fallthru
        _
      // Predicated region
      $region29: #{mask_predictor.1} parent=11 // pred_check
        %p308 = pneg %p150
      $region30: #{mask_predictor.1} parent=11 // pred_check_branch
        %310 = sbr.rel (%p308) target = $region32
      $region31: #{mask_predictor.1} parent=11 // pred_region
        _
      $region32: #{mask_predictor.1} parent=11 // pred_fallthru
        _
      // Predicated region
      $region33: #{mask_predictor.1} parent=11 // pred_check
        %p311 = pneg %p171
      $region34: #{mask_predictor.1} parent=11 // pred_check_branch
        %313 = sbr.rel (%p311) target = $region36
      $region35: #{mask_predictor.1} parent=11 // pred_region
        _
      $region36: #{mask_predictor.1} parent=11 // pred_fallthru
        _
      // Predicated region
      $region37: #{mask_predictor.1} parent=11 // pred_check
        %p314 = pneg %p192
      $region38: #{mask_predictor.1} parent=11 // pred_check_branch
        %316 = sbr.rel (%p314) target = $region40
      $region39: #{mask_predictor.1} parent=11 // pred_region
        _
      $region40: #{mask_predictor.1} parent=11 // pred_fallthru
        _
      // Predicated region
      $region41: #{mask_predictor.1} parent=11 // pred_check
        %p317 = pneg %p213
      $region42: #{mask_predictor.1} parent=11 // pred_check_branch
        %319 = sbr.rel (%p317) target = $region44
      $region43: #{mask_predictor.1} parent=11 // pred_region
        _
      $region44: #{mask_predictor.1} parent=11 // pred_fallthru
        _
      // Predicated region
      $region45: #{mask_predictor.1} parent=11 // pred_check
        %p320 = pneg %p234
      $region46: #{mask_predictor.1} parent=11 // pred_check_branch
        %322 = sbr.rel (%p320) target = $region48
      $region47: #{mask_predictor.1} parent=11 // pred_region
        _
      $region48: #{mask_predictor.1} parent=11 // pred_fallthru
        _
      // Predicated region
      $region49: #{mask_predictor.1} parent=11 // pred_check
        %p323 = pneg %p255
      $region50: #{mask_predictor.1} parent=11 // pred_check_branch
        %325 = sbr.rel (%p323) target = $region52
      $region51: #{mask_predictor.1} parent=11 // pred_region
        _
      $region52: #{mask_predictor.1} parent=11 // pred_fallthru
        _
    $region12: #{mask_predictor.1} parent=5 // pred_fallthru
      _
    %p326 = scmp.lt.s32.totalorder %s19, 2
    // Predicated region
    $region53: #{mask_predictor.1} parent=5 // pred_check
      %p327 = pneg %p326
    $region54: #{mask_predictor.1} parent=5 // pred_check_branch
      %329 = sbr.rel (%p327) target = $region56
    $region55: #{mask_predictor.1} parent=5 // pred_region
      // Predicated region
      $region57: #{mask_predictor.1} parent=55 // pred_check
        %p330 = pneg %p39
      $region58: #{mask_predictor.1} parent=55 // pred_check_branch
        %332 = sbr.rel (%p330) target = $region60
      $region59: #{mask_predictor.1} parent=55 // pred_region
        %p333 = scmp.lt.s32.totalorder %s19, 1
        %s334 = scalar_select %p333, %s19, 1
        %s335 = smul.addr %s334, 8
        %s336 = scalar_lea.vmem %s0, %s335
      $region60: #{mask_predictor.1} parent=55 // pred_fallthru
        _
    $region56: #{mask_predictor.1} parent=5 // pred_fallthru
      _
    %p337 = scmp.le.s32.totalorder 1, %s19
    %p338 = scmp.lt.s32.totalorder %s19, 3
    %p339 = pnand %p337, %p338
    %p340 = pneg %p339
    // Predicated region
    $region61: #{mask_predictor.1} parent=5 // pred_check
      _
    $region62: #{mask_predictor.1} parent=5 // pred_check_branch
      %342 = sbr.rel (%p339) target = $region64
    $region63: #{mask_predictor.1} parent=5 // pred_region
      %s343 = ssub.s32 %s19, 1
      %p344 = scmp.lt.s32.totalorder %s24, 1
      %s345 = scalar_select %p344, %s24, 1
      %s346 = smul.addr %s345, 8
      %s347 = scalar_lea.vmem %s0, %s346
      %p348 = pneg %p45
      %p349 = pneg %p42
      %p350 = pneg %p66
      %p351 = pneg %p63
      %p352 = pneg %p87
      %p353 = pneg %p84
      %p354 = pneg %p108
      %p355 = pneg %p105
      %p356 = pneg %p129
      %p357 = pneg %p126
      %p358 = pneg %p150
      %p359 = pneg %p147
      %p360 = pneg %p171
      %p361 = pneg %p168
      %p362 = pneg %p192
      %p363 = pneg %p189
      %p364 = pneg %p213
      %p365 = pneg %p210
      %p366 = pneg %p234
      %p367 = pneg %p231
      %p368 = pneg %p255
      %p369 = pneg %p252
      %p370 = pneg %p281
      %p371 = pneg %p278
      %p372 = scmp.lt.s32.totalorder %s24, 1
      %s373 = scalar_select %p372, %s24, 1
      %s374 = smul.addr %s373, 8
      %s375 = scalar_lea.vmem %s11, %s374
      %p376 = scmp.lt.s32.totalorder %s24, 1
      %s377 = scalar_select %p376, %s24, 1
      %s378 = smul.addr %s377, 8
      %s379 = scalar_lea.vmem %s0, %s378
      %p380 = scmp.lt.s32.totalorder %s24, 1
      %s381 = scalar_select %p380, %s24, 1
      %s382 = smul.addr %s381, 8
      %s383 = scalar_lea.vmem %s11, %s382
      %v384 = vld [vmem:[%s379] sm:$0xff]
      %vm385 = vcmask 261120
      %v386 = vsel %vm385, %v384, 0.0
      %387 = vadd.xlane.f32.xlu0 %v386
      %v388 = vpop.xlane.xlu0 %387
      %v389 = vrcp.pop 32.0
      %v390 = vmul.f32 %v388, %v389
      %v391 = vsub.f32 %v384, %v390
      %v392 = vmul.f32 %v391, %v391
      %v393 = vsel %vm385, %v392, 0.0
      %394 = vadd.xlane.f32.xlu0 %v393
      %v395 = vpop.xlane.xlu0 %394
      %v396 = vmul.f32 %v395, %v389
      %v397 = vadd.f32 %v396, 1e-05
      %v398 = vrsqrt.pop %v397
      %v399 = vmul.f32 %v391, %v398
      %v400 = vld [vmem:[%s1] sm:$0x1]
      %v402 = vlaneseq
      %v403 = vshrl.u32 %v402, 7
      %v404 = vsub.s32 0, %v403
      %v405 = vrot.slane %v400, %v404
      %v407 = vmul.f32 %v399, %v405
      %v408 = vld [vmem:[%s2] sm:$0x1]
      %v410 = vlaneseq
      %v411 = vshrl.u32 %v410, 7
      %v412 = vsub.s32 0, %v411
      %v413 = vrot.slane %v408, %v412
      %v415 = vadd.f32 %v407, %v413
      %v416 = vld [vmem:[%s3] sm:$0xff]
      %v417 = vld [vmem:[%s3 + $0x8] sm:$0xff]
      %v418 = vld [vmem:[%s3 + $0x10] sm:$0xff]
      %v419 = vld [vmem:[%s3 + $0x18] sm:$0xff]
      %v420 = vld [vmem:[%s4] sm:$0x1]
      %v422 = vlaneseq
      %v423 = vshrl.u32 %v422, 7
      %v424 = vsub.s32 0, %v423
      %v425 = vrot.slane %v420, %v424
      %v428 = vsel %vm385, %v415, 0
      %430 = vmatprep.subr.mxu0 0.0
      %431 = vmatpush1.msra.mxu0 %v416
      %432 = vmatprep.subr.mxu0 0.0
      %433 = vmatpush1.msra.mxu0 %v417
      %434 = vmatprep.subr.mxu0 0.0
      %435 = vmatpush1.msra.mxu0 %v418
      %436 = vmatprep.subr.mxu0 0.0
      %437 = vmatpush1.msra.mxu0 %v419
      %438 = vmatprep.subr.mxu0 0.0
      %439 = vmatpush1.msra.mxu0 0.0
      %440 = vmatprep.subr.mxu0 0.0
      %441 = vmatpush1.msra.mxu0 0.0
      %442 = vmatprep.subr.mxu0 0.0
      %443 = vmatpush1.msra.mxu0 0.0
      %444 = vmatprep.subr.mxu0 0.0
      %445 = vmatpush1.msra.mxu0 0.0
      %446 = vmatprep.subr.mxu0 0.0
      %447 = vmatpush1.msra.mxu0 0.0
      %448 = vmatprep.subr.mxu0 0.0
      %449 = vmatpush1.msra.mxu0 0.0
      %450 = vmatprep.subr.mxu0 0.0
      %451 = vmatpush1.msra.mxu0 0.0
      %452 = vmatprep.subr.mxu0 0.0
      %453 = vmatpush1.msra.mxu0 0.0
      %454 = vmatprep.subr.mxu0 0.0
      %455 = vmatpush1.msra.mxu0 0.0
      %456 = vmatprep.subr.mxu0 0.0
      %457 = vmatpush1.msra.mxu0 0.0
      %458 = vmatprep.subr.mxu0 0.0
      %459 = vmatpush1.msra.mxu0 0.0
      %460 = vmatprep.subr.mxu0 0.0
      %461 = vmatpush1.msra.mxu0 0.0
      %462 = vmatprep.subr.mxu0 0.0
      %463 = vmatpush1.msra.mxu0 0.0
      %464 = vmatprep.subr.mxu0 0.0
      %465 = vmatpush1.msra.mxu0 0.0
      %466 = vmatprep.subr.mxu0 0.0
      %467 = vmatpush1.msra.mxu0 0.0
      %468 = vmatprep.subr.mxu0 0.0
      %469 = vmatpush1.msra.mxu0 0.0
      %470 = vmatprep.subr.mxu0 0.0
      %471 = vmatpush1.msra.mxu0 0.0
      %472 = vmatprep.subr.mxu0 0.0
      %473 = vmatpush1.msra.mxu0 0.0
      %474 = vmatprep.subr.mxu0 0.0
      %475 = vmatpush1.msra.mxu0 0.0
      %476 = vmatprep.subr.mxu0 0.0
      %477 = vmatpush1.msra.mxu0 0.0
      %478 = vmatprep.subr.mxu0 0.0
      %479 = vmatpush1.msra.mxu0 0.0
      %480 = vmatprep.subr.mxu0 0.0
      %481 = vmatpush1.msra.mxu0 0.0
      %482 = vmatprep.subr.mxu0 0.0
      %483 = vmatpush1.msra.mxu0 0.0
      %484 = vmatprep.subr.mxu0 0.0
      %485 = vmatpush1.msra.mxu0 0.0
      %486 = vmatprep.subr.mxu0 0.0
      %487 = vmatpush1.msra.mxu0 0.0
      %488 = vmatprep.subr.mxu0 0.0
      %489 = vmatpush1.msra.mxu0 0.0
      %490 = vmatprep.subr.mxu0 0.0
      %491 = vmatpush1.msra.mxu0 0.0
      %492 = vmatprep.subr.mxu0 0.0
      %493 = vmatpush1.msra.mxu0 0.0
      %494 = vmatprep.mubr.f32.mxu0 0.0
      %495 = vmatmul.mubr.f32.gmra.mrb[0].mxu0 %v428
      %v496 = vpop.f32.mrb[0].mxu0
      %v497 = vadd.f32 %v425, %v496
      %v498 = vpop.f32.mrb[0].mxu0
      %499 = vdwg.mxu0
      %v500 = vmul.f32 %v497, 0.5
      %v501 = vmul.f32 %v497, 0.70710677
      %vm502 = vcmp.ge.f32.partialorder %v501, 0.0
      %v503 = vsel %vm502, 1.0, -1.0
      %v504 = vand.u32 2147483647, %v501
      %v505 = vmul.f32 %v504, 0.3275911
      %v506 = vadd.f32 %v505, 1.0
      %v507 = vrcp.pop %v506
      %v508 = vmul.f32 1.0, %v507
      %v509 = vmul.f32 %v508, 1.0614054
      %v510 = vadd.f32 %v509, -1.4531521
      %v511 = vmul.f32 %v510, %v508
      %v512 = vadd.f32 %v511, 1.4214138
      %v513 = vmul.f32 %v512, %v508
      %v514 = vadd.f32 %v513, -0.28449672
      %v515 = vmul.f32 %v514, %v508
      %v516 = vadd.f32 %v515, 0.2548296
      %v517 = vmul.f32 %v516, %v508
      %v518 = vsub.f32 0.0, %v504
      %v519 = vmul.f32 %v518, %v504
      %v520 = vmul.f32 %v519, 1.442695
      %v521 = vpow.pop %v520
      %v522 = vmul.f32 %v517, %v521
      %v523 = vsub.f32 1.0, %v522
      %v524 = vmul.f32 %v503, %v523
      %v525 = vadd.f32 %v524, 1.0
      %v526 = vmul.f32 %v500, %v525
      %vm527 = vcmask 523520
      %v528 = vsel %vm527, %v526, 0.0
      %v529 = vrot.slane %v528, 4
      %v530 = vadd.f32 %v528, %v529
      %v531 = vrot.slane %v530, 2
      %v532 = vadd.f32 %v530, %v531
      %v533 = vrot.slane %v532, 1
      %v534 = vadd.f32 %v532, %v533
      %v535 = vrcp.pop 8.0
      %v536 = vmul.f32 %v534, %v535
      %v537 = vld [vmem:[%s5] sm:$0xff]
      %v538 = vld [vmem:[%s5 + $0x8] sm:$0xff]
      %v539 = vld [vmem:[%s5 + $0x10] sm:$0xff]
      %v540 = vld [vmem:[%s5 + $0x18] sm:$0xff]
      %v541 = vld [vmem:[%s5 + $0x20] sm:$0xff]
      %v542 = vld [vmem:[%s5 + $0x28] sm:$0xff]
      %v543 = vld [vmem:[%s5 + $0x30] sm:$0xff]
      %v544 = vld [vmem:[%s5 + $0x38] sm:$0xff]
      %546 = vrot.lane.b32.xlu0 %v536, 96
      %v547 = vpop.permute.xlu0 %546
      %v548 = vsel %vm385, %v547, 0
      %550 = vmatprep.subr.mxu0 0.0
      %551 = vmatpush1.msra.mxu0 %v541
      %552 = vmatprep.subr.mxu0 0.0
      %553 = vmatpush1.msra.mxu0 %v542
      %554 = vmatprep.subr.mxu0 0.0
      %555 = vmatpush1.msra.mxu0 %v543
      %556 = vmatprep.subr.mxu0 0.0
      %557 = vmatpush1.msra.mxu0 %v544
      %558 = vmatprep.subr.mxu0 0.0
      %559 = vmatpush1.msra.mxu0 0.0
      %560 = vmatprep.subr.mxu0 0.0
      %561 = vmatpush1.msra.mxu0 0.0
      %562 = vmatprep.subr.mxu0 0.0
      %563 = vmatpush1.msra.mxu0 0.0
      %564 = vmatprep.subr.mxu0 0.0
      %565 = vmatpush1.msra.mxu0 0.0
      %566 = vmatprep.subr.mxu0 0.0
      %567 = vmatpush1.msra.mxu0 0.0
      %568 = vmatprep.subr.mxu0 0.0
      %569 = vmatpush1.msra.mxu0 0.0
      %570 = vmatprep.subr.mxu0 0.0
      %571 = vmatpush1.msra.mxu0 0.0
      %572 = vmatprep.subr.mxu0 0.0
      %573 = vmatpush1.msra.mxu0 0.0
      %574 = vmatprep.subr.mxu0 0.0
      %575 = vmatpush1.msra.mxu0 0.0
      %576 = vmatprep.subr.mxu0 0.0
      %577 = vmatpush1.msra.mxu0 0.0
      %578 = vmatprep.subr.mxu0 0.0
      %579 = vmatpush1.msra.mxu0 0.0
      %580 = vmatprep.subr.mxu0 0.0
      %581 = vmatpush1.msra.mxu0 0.0
      %582 = vmatprep.subr.mxu0 0.0
      %583 = vmatpush1.msra.mxu0 0.0
      %584 = vmatprep.subr.mxu0 0.0
      %585 = vmatpush1.msra.mxu0 0.0
      %586 = vmatprep.subr.mxu0 0.0
      %587 = vmatpush1.msra.mxu0 0.0
      %588 = vmatprep.subr.mxu0 0.0
      %589 = vmatpush1.msra.mxu0 0.0
      %590 = vmatprep.subr.mxu0 0.0
      %591 = vmatpush1.msra.mxu0 0.0
      %592 = vmatprep.subr.mxu0 0.0
      %593 = vmatpush1.msra.mxu0 0.0
      %594 = vmatprep.subr.mxu0 0.0
      %595 = vmatpush1.msra.mxu0 0.0
      %596 = vmatprep.subr.mxu0 0.0
      %597 = vmatpush1.msra.mxu0 0.0
      %598 = vmatprep.subr.mxu0 0.0
      %599 = vmatpush1.msra.mxu0 0.0
      %600 = vmatprep.subr.mxu0 0.0
      %601 = vmatpush1.msra.mxu0 0.0
      %602 = vmatprep.subr.mxu0 0.0
      %603 = vmatpush1.msra.mxu0 0.0
      %604 = vmatprep.subr.mxu0 0.0
      %605 = vmatpush1.msra.mxu0 0.0
      %606 = vmatprep.subr.mxu0 0.0
      %607 = vmatpush1.msra.mxu0 0.0
      %608 = vmatprep.subr.mxu0 0.0
      %609 = vmatpush1.msra.mxu0 0.0
      %610 = vmatprep.subr.mxu0 0.0
      %611 = vmatpush1.msra.mxu0 0.0
      %612 = vmatprep.subr.mxu0 0.0
      %613 = vmatpush1.msra.mxu0 0.0
      %614 = vmatprep.mubr.f32.mxu0 0.0
      %615 = vmatmul.mubr.f32.gmra.mrb[0].mxu0 %v548
      %v616 = vpop.f32.mrb[0].mxu0
      %v617 = vadd.f32 0.0, %v616
      %v618 = vpop.f32.mrb[0].mxu0
      %619 = vdwg.mxu0
      %v620 = vlaneseq
      %v621 = vshrl.u32 %v620, 7
      %v622 = vsub.s32 0, %v621
      %v623 = vrot.slane %v617, %v622
      %v625 = vsel %vm385, %v526, 0
      %627 = vmatprep.subr.mxu0 0.0
      %628 = vmatpush1.msra.mxu0 %v537
      %629 = vmatprep.subr.mxu0 0.0
      %630 = vmatpush1.msra.mxu0 %v538
      %631 = vmatprep.subr.mxu0 0.0
      %632 = vmatpush1.msra.mxu0 %v539
      %633 = vmatprep.subr.mxu0 0.0
      %634 = vmatpush1.msra.mxu0 %v540
      %635 = vmatprep.subr.mxu0 0.0
      %636 = vmatpush1.msra.mxu0 0.0
      %637 = vmatprep.subr.mxu0 0.0
      %638 = vmatpush1.msra.mxu0 0.0
      %639 = vmatprep.subr.mxu0 0.0
      %640 = vmatpush1.msra.mxu0 0.0
      %641 = vmatprep.subr.mxu0 0.0
      %642 = vmatpush1.msra.mxu0 0.0
      %643 = vmatprep.subr.mxu0 0.0
      %644 = vmatpush1.msra.mxu0 0.0
      %645 = vmatprep.subr.mxu0 0.0
      %646 = vmatpush1.msra.mxu0 0.0
      %647 = vmatprep.subr.mxu0 0.0
      %648 = vmatpush1.msra.mxu0 0.0
      %649 = vmatprep.subr.mxu0 0.0
      %650 = vmatpush1.msra.mxu0 0.0
      %651 = vmatprep.subr.mxu0 0.0
      %652 = vmatpush1.msra.mxu0 0.0
      %653 = vmatprep.subr.mxu0 0.0
      %654 = vmatpush1.msra.mxu0 0.0
      %655 = vmatprep.subr.mxu0 0.0
      %656 = vmatpush1.msra.mxu0 0.0
      %657 = vmatprep.subr.mxu0 0.0
      %658 = vmatpush1.msra.mxu0 0.0
      %659 = vmatprep.subr.mxu0 0.0
      %660 = vmatpush1.msra.mxu0 0.0
      %661 = vmatprep.subr.mxu0 0.0
      %662 = vmatpush1.msra.mxu0 0.0
      %663 = vmatprep.subr.mxu0 0.0
      %664 = vmatpush1.msra.mxu0 0.0
      %665 = vmatprep.subr.mxu0 0.0
      %666 = vmatpush1.msra.mxu0 0.0
      %667 = vmatprep.subr.mxu0 0.0
      %668 = vmatpush1.msra.mxu0 0.0
      %669 = vmatprep.subr.mxu0 0.0
      %670 = vmatpush1.msra.mxu0 0.0
      %671 = vmatprep.subr.mxu0 0.0
      %672 = vmatpush1.msra.mxu0 0.0
      %673 = vmatprep.subr.mxu0 0.0
      %674 = vmatpush1.msra.mxu0 0.0
      %675 = vmatprep.subr.mxu0 0.0
      %676 = vmatpush1.msra.mxu0 0.0
      %677 = vmatprep.subr.mxu0 0.0
      %678 = vmatpush1.msra.mxu0 0.0
      %679 = vmatprep.subr.mxu0 0.0
      %680 = vmatpush1.msra.mxu0 0.0
      %681 = vmatprep.subr.mxu0 0.0
      %682 = vmatpush1.msra.mxu0 0.0
      %683 = vmatprep.subr.mxu0 0.0
      %684 = vmatpush1.msra.mxu0 0.0
      %685 = vmatprep.subr.mxu0 0.0
      %686 = vmatpush1.msra.mxu0 0.0
      %687 = vmatprep.subr.mxu0 0.0
      %688 = vmatpush1.msra.mxu0 0.0
      %689 = vmatprep.subr.mxu0 0.0
      %690 = vmatpush1.msra.mxu0 0.0
      %691 = vmatprep.mubr.f32.mxu0 0.0
      %692 = vmatmul.mubr.f32.gmra.mrb[0].mxu0 %v625
      %v693 = vpop.f32.mrb[0].mxu0
      %v694 = vadd.f32 %v623, %v693
      %v695 = vpop.f32.mrb[0].mxu0
      %696 = vdwg.mxu0
      %v697 = vld [vmem:[%s6] sm:$0x1]
      %v699 = vlaneseq
      %v700 = vshrl.u32 %v699, 7
      %v701 = vsub.s32 0, %v700
      %v702 = vrot.slane %v697, %v701
      %v704 = vadd.f32 %v694, %v702
      %v705 = vmul.f32 %v704, 0.5
      %v706 = vmul.f32 %v704, 0.70710677
      %vm707 = vcmp.ge.f32.partialorder %v706, 0.0
      %v708 = vsel %vm707, 1.0, -1.0
      %v709 = vand.u32 2147483647, %v706
      %v710 = vmul.f32 %v709, 0.3275911
      %v711 = vadd.f32 %v710, 1.0
      %v712 = vrcp.pop %v711
      %v713 = vmul.f32 1.0, %v712
      %v714 = vmul.f32 %v713, 1.0614054
      %v715 = vadd.f32 %v714, -1.4531521
      %v716 = vmul.f32 %v715, %v713
      %v717 = vadd.f32 %v716, 1.4214138
      %v718 = vmul.f32 %v717, %v713
      %v719 = vadd.f32 %v718, -0.28449672
      %v720 = vmul.f32 %v719, %v713
      %v721 = vadd.f32 %v720, 0.2548296
      %v722 = vmul.f32 %v721, %v713
      %v723 = vsub.f32 0.0, %v709
      %v724 = vmul.f32 %v723, %v709
      %v725 = vmul.f32 %v724, 1.442695
      %v726 = vpow.pop %v725
      %v727 = vmul.f32 %v722, %v726
      %v728 = vsub.f32 1.0, %v727
      %v729 = vmul.f32 %v708, %v728
      %v730 = vadd.f32 %v729, 1.0
      %v731 = vmul.f32 %v705, %v730
      %v732 = vld [vmem:[%s7] sm:$0xff]
      %v733 = vld [vmem:[%s7 + $0x8] sm:$0xff]
      %v734 = vld [vmem:[%s7 + $0x10] sm:$0xff]
      %v735 = vld [vmem:[%s7 + $0x18] sm:$0xff]
      %v736 = vld [vmem:[%s8] sm:$0x1]
      %v738 = vlaneseq
      %v739 = vshrl.u32 %v738, 7
      %v740 = vsub.s32 0, %v739
      %v741 = vrot.slane %v736, %v740
      %v744 = vsel %vm385, %v731, 0
      %746 = vmatprep.subr.mxu0 0.0
      %747 = vmatpush1.msra.mxu0 %v732
      %748 = vmatprep.subr.mxu0 0.0
      %749 = vmatpush1.msra.mxu0 %v733
      %750 = vmatprep.subr.mxu0 0.0
      %751 = vmatpush1.msra.mxu0 %v734
      %752 = vmatprep.subr.mxu0 0.0
      %753 = vmatpush1.msra.mxu0 %v735
      %754 = vmatprep.subr.mxu0 0.0
      %755 = vmatpush1.msra.mxu0 0.0
      %756 = vmatprep.subr.mxu0 0.0
      %757 = vmatpush1.msra.mxu0 0.0
      %758 = vmatprep.subr.mxu0 0.0
      %759 = vmatpush1.msra.mxu0 0.0
      %760 = vmatprep.subr.mxu0 0.0
      %761 = vmatpush1.msra.mxu0 0.0
      %762 = vmatprep.subr.mxu0 0.0
      %763 = vmatpush1.msra.mxu0 0.0
      %764 = vmatprep.subr.mxu0 0.0
      %765 = vmatpush1.msra.mxu0 0.0
      %766 = vmatprep.subr.mxu0 0.0
      %767 = vmatpush1.msra.mxu0 0.0
      %768 = vmatprep.subr.mxu0 0.0
      %769 = vmatpush1.msra.mxu0 0.0
      %770 = vmatprep.subr.mxu0 0.0
      %771 = vmatpush1.msra.mxu0 0.0
      %772 = vmatprep.subr.mxu0 0.0
      %773 = vmatpush1.msra.mxu0 0.0
      %774 = vmatprep.subr.mxu0 0.0
      %775 = vmatpush1.msra.mxu0 0.0
      %776 = vmatprep.subr.mxu0 0.0
      %777 = vmatpush1.msra.mxu0 0.0
      %778 = vmatprep.subr.mxu0 0.0
      %779 = vmatpush1.msra.mxu0 0.0
      %780 = vmatprep.subr.mxu0 0.0
      %781 = vmatpush1.msra.mxu0 0.0
      %782 = vmatprep.subr.mxu0 0.0
      %783 = vmatpush1.msra.mxu0 0.0
      %784 = vmatprep.subr.mxu0 0.0
      %785 = vmatpush1.msra.mxu0 0.0
      %786 = vmatprep.subr.mxu0 0.0
      %787 = vmatpush1.msra.mxu0 0.0
      %788 = vmatprep.subr.mxu0 0.0
      %789 = vmatpush1.msra.mxu0 0.0
      %790 = vmatprep.subr.mxu0 0.0
      %791 = vmatpush1.msra.mxu0 0.0
      %792 = vmatprep.subr.mxu0 0.0
      %793 = vmatpush1.msra.mxu0 0.0
      %794 = vmatprep.subr.mxu0 0.0
      %795 = vmatpush1.msra.mxu0 0.0
      %796 = vmatprep.subr.mxu0 0.0
      %797 = vmatpush1.msra.mxu0 0.0
      %798 = vmatprep.subr.mxu0 0.0
      %799 = vmatpush1.msra.mxu0 0.0
      %800 = vmatprep.subr.mxu0 0.0
      %801 = vmatpush1.msra.mxu0 0.0
      %802 = vmatprep.subr.mxu0 0.0
      %803 = vmatpush1.msra.mxu0 0.0
      %804 = vmatprep.subr.mxu0 0.0
      %805 = vmatpush1.msra.mxu0 0.0
      %806 = vmatprep.subr.mxu0 0.0
      %807 = vmatpush1.msra.mxu0 0.0
      %808 = vmatprep.subr.mxu0 0.0
      %809 = vmatpush1.msra.mxu0 0.0
      %810 = vmatprep.mubr.f32.mxu0 0.0
      %811 = vmatmul.mubr.f32.gmra.mrb[0].mxu0 %v744
      %v812 = vpop.f32.mrb[0].mxu0
      %v813 = vadd.f32 %v741, %v812
      %v814 = vpop.f32.mrb[0].mxu0
      %815 = vdwg.mxu0
      %v816 = vmul.f32 %v813, 0.5
      %v817 = vmul.f32 %v813, 0.70710677
      %vm818 = vcmp.ge.f32.partialorder %v817, 0.0
      %v819 = vsel %vm818, 1.0, -1.0
      %v820 = vand.u32 2147483647, %v817
      %v821 = vmul.f32 %v820, 0.3275911
      %v822 = vadd.f32 %v821, 1.0
      %v823 = vrcp.pop %v822
      %v824 = vmul.f32 1.0, %v823
      %v825 = vmul.f32 %v824, 1.0614054
      %v826 = vadd.f32 %v825, -1.4531521
      %v827 = vmul.f32 %v826, %v824
      %v828 = vadd.f32 %v827, 1.4214138
      %v829 = vmul.f32 %v828, %v824
      %v830 = vadd.f32 %v829, -0.28449672
      %v831 = vmul.f32 %v830, %v824
      %v832 = vadd.f32 %v831, 0.2548296
      %v833 = vmul.f32 %v832, %v824
      %v834 = vsub.f32 0.0, %v820
      %v835 = vmul.f32 %v834, %v820
      %v836 = vmul.f32 %v835, 1.442695
      %v837 = vpow.pop %v836
      %v838 = vmul.f32 %v833, %v837
      %v839 = vsub.f32 1.0, %v838
      %v840 = vmul.f32 %v819, %v839
      %v841 = vadd.f32 %v840, 1.0
      %v842 = vmul.f32 %v816, %v841
      %v843 = vld [vmem:[%s9] sm:$0xff]
      %v844 = vld [vmem:[%s9 + $0x8] sm:$0xff]
      %v845 = vld [vmem:[#allocation2] sm:$0x1]
      %v847 = vlaneseq
      %v848 = vshrl.u32 %v847, 7
      %v849 = vsub.s32 0, %v848
      %v850 = vrot.slane %v845, %v849
      %vm852 = vcmask 130048
      %v854 = vsel %vm852, %v842, 0
      %856 = vmatprep.subr.mxu0 0.0
      %857 = vmatpush1.msra.mxu0 %v843
      %858 = vmatprep.subr.mxu0 0.0
      %859 = vmatpush1.msra.mxu0 %v844
      %860 = vmatprep.subr.mxu0 0.0
      %861 = vmatpush1.msra.mxu0 0.0
      %862 = vmatprep.subr.mxu0 0.0
      %863 = vmatpush1.msra.mxu0 0.0
      %864 = vmatprep.subr.mxu0 0.0
      %865 = vmatpush1.msra.mxu0 0.0
      %866 = vmatprep.subr.mxu0 0.0
      %867 = vmatpush1.msra.mxu0 0.0
      %868 = vmatprep.subr.mxu0 0.0
      %869 = vmatpush1.msra.mxu0 0.0
      %870 = vmatprep.subr.mxu0 0.0
      %871 = vmatpush1.msra.mxu0 0.0
      %872 = vmatprep.subr.mxu0 0.0
      %873 = vmatpush1.msra.mxu0 0.0
      %874 = vmatprep.subr.mxu0 0.0
      %875 = vmatpush1.msra.mxu0 0.0
      %876 = vmatprep.subr.mxu0 0.0
      %877 = vmatpush1.msra.mxu0 0.0
      %878 = vmatprep.subr.mxu0 0.0
      %879 = vmatpush1.msra.mxu0 0.0
      %880 = vmatprep.subr.mxu0 0.0
      %881 = vmatpush1.msra.mxu0 0.0
      %882 = vmatprep.subr.mxu0 0.0
      %883 = vmatpush1.msra.mxu0 0.0
      %884 = vmatprep.subr.mxu0 0.0
      %885 = vmatpush1.msra.mxu0 0.0
      %886 = vmatprep.subr.mxu0 0.0
      %887 = vmatpush1.msra.mxu0 0.0
      %888 = vmatprep.subr.mxu0 0.0
      %889 = vmatpush1.msra.mxu0 0.0
      %890 = vmatprep.subr.mxu0 0.0
      %891 = vmatpush1.msra.mxu0 0.0
      %892 = vmatprep.subr.mxu0 0.0
      %893 = vmatpush1.msra.mxu0 0.0
      %894 = vmatprep.subr.mxu0 0.0
      %895 = vmatpush1.msra.mxu0 0.0
      %896 = vmatprep.subr.mxu0 0.0
      %897 = vmatpush1.msra.mxu0 0.0
      %898 = vmatprep.subr.mxu0 0.0
      %899 = vmatpush1.msra.mxu0 0.0
      %900 = vmatprep.subr.mxu0 0.0
      %901 = vmatpush1.msra.mxu0 0.0
      %902 = vmatprep.subr.mxu0 0.0
      %903 = vmatpush1.msra.mxu0 0.0
      %904 = vmatprep.subr.mxu0 0.0
      %905 = vmatpush1.msra.mxu0 0.0
      %906 = vmatprep.subr.mxu0 0.0
      %907 = vmatpush1.msra.mxu0 0.0
      %908 = vmatprep.subr.mxu0 0.0
      %909 = vmatpush1.msra.mxu0 0.0
      %910 = vmatprep.subr.mxu0 0.0
      %911 = vmatpush1.msra.mxu0 0.0
      %912 = vmatprep.subr.mxu0 0.0
      %913 = vmatpush1.msra.mxu0 0.0
      %914 = vmatprep.subr.mxu0 0.0
      %915 = vmatpush1.msra.mxu0 0.0
      %916 = vmatprep.subr.mxu0 0.0
      %917 = vmatpush1.msra.mxu0 0.0
      %918 = vmatprep.subr.mxu0 0.0
      %919 = vmatpush1.msra.mxu0 0.0
      %920 = vmatprep.mubr.f32.mxu0 0.0
      %921 = vmatmul.mubr.f32.gmra.mrb[0].mxu0 %v854
      %v922 = vpop.f32.mrb[0].mxu0
      %v923 = vadd.f32 %v850, %v922
      %v924 = vpop.f32.mrb[0].mxu0
      %925 = vdwg.mxu0
      %vm926 = vcmask 7168
      %927 = vst.msk [vmem:[%s383] sm:$0xff] %vm926, %v923
      %p928 = scmp.lt.s32.totalorder %s24, 1
      %s929 = scalar_select %p928, %s24, 1
      %s930 = smul.addr %s929, 8
      %s931 = scalar_lea.vmem %s11, %s930
      // Predicated region
      $region65: #{mask_predictor.1} parent=63 // pred_check
        %p932 = pneg %p278
      $region66: #{mask_predictor.1} parent=63 // pred_check_branch
        %934 = sbr.rel (%p932) target = $region68
      $region67: #{mask_predictor.1} parent=63 // pred_region
        _
      $region68: #{mask_predictor.1} parent=63 // pred_fallthru
        _
    $region64: #{mask_predictor.1} parent=5 // pred_fallthru
      _
    %p935 = scmp.le.s32.totalorder 2, %s19
    // Predicated region
    $region69: #{mask_predictor.1} parent=5 // pred_check
      %p936 = pneg %p935
    $region70: #{mask_predictor.1} parent=5 // pred_check_branch
      %938 = sbr.rel (%p936) target = $region72
    $region71: #{mask_predictor.1} parent=5 // pred_region
      %s939 = ssub.s32 %s19, 2
      // Predicated region
      $region73: #{mask_predictor.1} parent=71 // pred_check
        %p940 = pneg %p284
      $region74: #{mask_predictor.1} parent=71 // pred_check_branch
        %942 = sbr.rel (%p940) target = $region76
      $region75: #{mask_predictor.1} parent=71 // pred_region
        %p943 = scmp.lt.s32.totalorder %s25, 1
        %s944 = scalar_select %p943, %s25, 1
        %s945 = smul.addr %s944, 8
        %s946 = scalar_lea.vmem %s11, %s945
      $region76: #{mask_predictor.1} parent=71 // pred_fallthru
        _
    $region72: #{mask_predictor.1} parent=5 // pred_fallthru
      _
  $region6: #{mask_predictor.1} parent=0 // loop_footer
    %s23 = sadd.s32 1, %s19
  $region7: #{mask_predictor.1} parent=0 // loop_footer_branch
    %18 = sbr.rel target = $region3
  $region8: #{mask_predictor.1} parent=0 // loop_exit
    _

</llo_original>
